<compile_context>
chip_gen: v7x
topology: tpu7x:2x2x1
jax: 0.10.0
libtpu: 0.0.40
codegen_flags: <defaults>
</compile_context>

<pallas_src>
import jax
import jax.numpy as jnp
import numpy as np
from jax.experimental import pallas as pl
from jax.experimental.pallas import tpu as pltpu


# ---------------- Pallas kernel (fully fused forward, batch-packed) ----------------

def fused_policy_kernel(x_ref, wemb_ref, w1_ref, b1_ref, wh_ref, bh_ref, out_ref):
    # x:    (TB, P*K)       K = C0*C1, P batch rows packed per 128-lane row
    # wemb: (P*K, P*E)      block-diag folded Conv1d(k=1)+Transpose+Flatten weight
    # w1:   (P*E, P*H), b1: (1, P*H)                       (f32 bias)
    # wh:   (P*H, P*NP), bh:(1, P*NP)   NP = 8 = pad(A+1)  (f32 bias)
    # out:  (TB, P*NP)      f32
    emb = jnp.dot(x_ref[...], wemb_ref[...], preferred_element_type=jnp.float32)
    emb = jnp.maximum(emb, 0.0)                                     # ReLU(embeddings(x))
    h = jnp.dot(emb.astype(w1_ref.dtype), w1_ref[...],
                preferred_element_type=jnp.float32) + b1_ref[...]
    h = jnp.maximum(h, 0.0)                                         # common Linear + ReLU
    out_ref[...] = (jnp.dot(h.astype(wh_ref.dtype), wh_ref[...],
                            preferred_element_type=jnp.float32)
                    + bh_ref[...])                                  # [action | value | pad]


# ---------------- one-time parameter preparation (outside hot path) -----------

def prepare_params(params, obs_shape, embedding_size, use_bf16=False):
    """Fold conv, pre-transpose, concat+pad heads, block-diagonalize for batch
    packing, and (optionally) cast matmul weights to bf16.  Done once."""
    C0, C1 = obs_shape
    Oc = embedding_size // C1
    E = Oc * C1
    K = C0 * C1
    P = max(1, 128 // K)                                            # batch-pack factor (4 here)

    # Fold Conv1d(k=1, no bias) + Transpose + Flatten into one matmul weight:
    #   emb[b, l*Oc + o] = sum_c x[b, c, l] * conv_w[o, c]
    #   -> w_emb[c*C1 + l, m*Oc + o] = conv_w[o, c] * delta(l, m)
    conv_w = params["conv_w"].astype(jnp.float32)                   # (Oc, C0)
    eye = jnp.eye(C1, dtype=jnp.float32)
    w_emb = jnp.einsum("oc,lm->clmo", conv_w, eye).reshape(K, E)

    w1_t = params["w1"].T.astype(jnp.float32)                       # (E, H)
    b1 = params["b1"].reshape(1, -1).astype(jnp.float32)            # (1, H)

    # Concatenated [action | value] head, zero-padded only to 8 columns.
    A = params["wa"].shape[0]
    NPAD = 8 * pl.cdiv(A + 1, 8)                                    # 7 -> 8
    w_head = jnp.concatenate([params["wa"].T, params["wv"].T], axis=1)     # (H, A+1)
    b_head = jnp.concatenate([params["ba"], params["bv"]]).reshape(1, -1)  # (1, A+1)
    w_head = jnp.pad(w_head, ((0, 0), (0, NPAD - (A + 1)))).astype(jnp.float32)
    b_head = jnp.pad(b_head, ((0, 0), (0, NPAD - (A + 1)))).astype(jnp.float32)

    # Block-diagonalize (kron(I_P, W)) / tile biases for P-way batch packing.
    eyeP = jnp.eye(P, dtype=jnp.float32)
    w_emb_p = jnp.kron(eyeP, w_emb)                                 # (P*K, P*E)
    w1_p = jnp.kron(eyeP, w1_t)                                     # (P*E, P*H)
    w_head_p = jnp.kron(eyeP, w_head)                               # (P*H, P*NPAD)
    b1_p = jnp.tile(b1, (1, P))                                     # (1, P*H)  f32
    b_head_p = jnp.tile(b_head, (1, P))                             # (1, P*NPAD) f32

    wdt = jnp.bfloat16 if use_bf16 else jnp.float32
    return {
        "w_emb": w_emb_p.astype(wdt),
        "w1_t": w1_p.astype(wdt),
        "w_head": w_head_p.astype(wdt),
        "b1": b1_p,                      # biases stay f32 (added to f32 accumulator)
        "b_head": b_head_p,
        "pack": P,
        "num_actions": A,
        "padded_heads": NPAD,
        "in_dtype": wdt,
    }


# ---------------- forward wrapper ----------------

def conv1d_policy_forward(x, prep, obs_shape):
    C0, C1 = obs_shape
    x = x.reshape((-1, C0, C1))                                     # module's defensive reshape
    B = x.shape[0]
    K = C0 * C1
    P = prep["pack"]
    A = prep["num_actions"]
    NPAD = prep["padded_heads"]
    in_dtype = prep["in_dtype"]

    # Pack P consecutive batch rows into one 128-lane row (free reshape; tiny
    # zero-row pad only when B % P != 0).  Computation is purely row-wise, so
    # pad rows / partial last grid blocks are safe and sliced off at the end.
    Brows = P * pl.cdiv(B, P)
    xflat = x.reshape(B, K).astype(in_dtype)
    if Brows != B:
        xflat = jnp.pad(xflat, ((0, Brows - B), (0, 0)))
    Bp = Brows // P
    xpacked = xflat.reshape(Bp, P * K)

    KP = P * K
    HP = prep["b1"].shape[1]
    EP = prep["w_emb"].shape[1]
    NP = P * NPAD

    # Batch tile (in packed rows):
    #   * small batch -> single block (block dim == full dim, no 8-divisibility needed)
    #   * otherwise   -> multiple of 8, >= 2 grid steps (v7x has 2 TensorCores),
    #                    capped at 2048 packed rows (= 8192 original rows) per step.
    if Bp <= 16:
        tb = Bp
    else:
        tb = min(2048, 8 * pl.cdiv(pl.cdiv(Bp, 2), 8))
    grid = (pl.cdiv(Bp, tb),)

    # Explicit VMEM budget: 2 buffers of (x tile + out tile) + resident weights + slack.
    itemsize = jnp.dtype(in_dtype).itemsize
    weight_bytes = (prep["w_emb"].size + prep["w1_t"].size + prep["w_head"].size) * itemsize \
                   + (prep["b1"].size + prep["b_head"].size) * 4
    vmem_bytes = int(2 * tb * (KP * itemsize + NP * 4) + weight_bytes + (2 << 20))
    vmem_bytes = max(vmem_bytes, 16 << 20)                          # comfortable floor, < all gens' physical VMEM

    out = pl.pallas_call(
        fused_policy_kernel,
        out_shape=jax.ShapeDtypeStruct((Bp, NP), jnp.float32),
        grid_spec=pltpu.PrefetchScalarGridSpec(
            num_scalar_prefetch=0,
            grid=grid,
            in_specs=[
                pl.BlockSpec((tb, KP), lambda i: (i, 0)),           # x: tiled over (packed) batch
                pl.BlockSpec((KP, EP), lambda i: (0, 0)),           # weights: VMEM-resident
                pl.BlockSpec((EP, HP), lambda i: (0, 0)),
                pl.BlockSpec((1, HP), lambda i: (0, 0)),
                pl.BlockSpec((HP, NP), lambda i: (0, 0)),
                pl.BlockSpec((1, NP), lambda i: (0, 0)),
            ],
            out_specs=pl.BlockSpec((tb, NP), lambda i: (i, 0)),     # narrow (32-col) output
        ),
        compiler_params=pltpu.CompilerParams(
            dimension_semantics=("parallel",),                      # megacore over batch tiles
            vmem_limit_bytes=vmem_bytes),
    )(xpacked, prep["w_emb"], prep["w1_t"], prep["b1"],
      prep["w_head"], prep["b_head"])

    # (Bp, P*NPAD) -> (Bp*P, NPAD) row-major unpack, drop batch pad, slice heads.
    out = out.reshape(Bp * P, NPAD)[:B]
    act = out[:, :A]
    val = out[:, A:A + 1]
    return act, val


# ---------------- pure-JAX reference (original param layout) ----------------

def ref_forward(x, p, obs_shape, embedding_size):
    C0, C1 = obs_shape
    Oc = embedding_size // C1
    x = x.reshape((-1, C0, C1)).astype(jnp.float32)
    B = x.shape[0]
    conv = jnp.einsum('bcl,oc->bol', x, p["conv_w"])                # Conv1d(k=1, no bias)
    embf = jnp.transpose(conv, (0, 2, 1)).reshape(B, C1 * Oc)       # Transpose + Flatten
    h = jnp.maximum(embf, 0.0)
    h = jnp.maximum(h @ p["w1"].T + p["b1"], 0.0)
    act = h @ p["wa"].T + p["ba"]
    val = h @ p["wv"].T + p["bv"]
    return act, val


# ---------------- main ----------------

if __name__ == "__main__":
    # Small shapes consistent with the module:
    obs_shape = (4, 8)        # (C0, C1); conv_dim = 0
    embedding_size = 32       # Oc = 32 // 8 = 4, E = 32
    num_actions = 6
    hidden = 32               # common_layers = (32,)
    B = 2

    C0, C1 = obs_shape
    Oc = embedding_size // C1

    key = jax.random.PRNGKey(0)
    ks = jax.random.split(key, 8)
    params = {
        # Conv1d weight (out_channels, in_channels, 1) -> squeezed to (Oc, C0)
        "conv_w": jax.random.normal(ks[0], (Oc, C0), jnp.float32) * 0.2,
        # common: Linear(E -> hidden)
        "w1": jax.random.normal(ks[1], (hidden, Oc * C1), jnp.float32) * 0.1,
        "b1": jax.random.normal(ks[2], (hidden,), jnp.float32) * 0.1,
        # action head: Linear(hidden -> num_actions)
        "wa": jax.random.normal(ks[3], (num_actions, hidden), jnp.float32) * 0.1,
        "ba": jax.random.normal(ks[4], (num_actions,), jnp.float32) * 0.1,
        # value head: Linear(hidden -> 1)
        "wv": jax.random.normal(ks[5], (1, hidden), jnp.float32) * 0.1,
        "bv": jax.random.normal(ks[6], (1,), jnp.float32) * 0.1,
    }

    x = jax.random.normal(ks[7], (B, C0, C1), jnp.float32)
    act_ref, val_ref = ref_forward(x, params, obs_shape, embedding_size)

    # --- exact f32 path (unit test) ---
    prep_f32 = prepare_params(params, obs_shape, embedding_size, use_bf16=False)
    jax.block_until_ready(tuple(v for v in prep_f32.values() if isinstance(v, jax.Array)))

    act, val = conv1d_policy_forward(x, prep_f32, obs_shape)
    jax.block_until_ready((act, val))
    np.testing.assert_allclose(np.asarray(act), np.asarray(act_ref), rtol=1e-5, atol=1e-5)
    np.testing.assert_allclose(np.asarray(val), np.asarray(val_ref), rtol=1e-5, atol=1e-5)

    # --- bf16 large-batch path (halved x HBM read, native-rate MXU), loose tolerance ---
    prep_bf16 = prepare_params(params, obs_shape, embedding_size, use_bf16=True)
    jax.block_until_ready(tuple(v for v in prep_bf16.values() if isinstance(v, jax.Array)))

    act_b, val_b = conv1d_policy_forward(x, prep_bf16, obs_shape)
    jax.block_until_ready((act_b, val_b))
    np.testing.assert_allclose(np.asarray(act_b), np.asarray(act_ref), rtol=5e-2, atol=5e-2)
    np.testing.assert_allclose(np.asarray(val_b), np.asarray(val_ref), rtol=5e-2, atol=5e-2)

    print("KERNEL_OK")
</pallas_src>

<mosaic_0001>
module attributes {stable_mosaic.version = 11 : i64} {
  func.func @fused_policy_kernel(%arg0: i32, %arg1: memref<1x128xf32, #tpu.memory_space<vmem>>, %arg2: memref<128x128xf32, #tpu.memory_space<vmem>>, %arg3: memref<128x128xf32, #tpu.memory_space<vmem>>, %arg4: memref<1x128xf32, #tpu.memory_space<vmem>>, %arg5: memref<128x32xf32, #tpu.memory_space<vmem>>, %arg6: memref<1x32xf32, #tpu.memory_space<vmem>>, %arg7: memref<1x32xf32, #tpu.memory_space<vmem>>) attributes {dimension_semantics = [#tpu.dimension_semantics<parallel>], iteration_bounds = array<i64: 1>, scalar_prefetch = 0 : i64, scratch_operands = 0 : i64, tpu.core_type = #tpu.core_type<tc>, window_params = [{transform_indices = @transform_0, window_bounds = array<i64: 1, 128>}, {pipeline_mode = #tpu.pipeline_mode<synchronous>, transform_indices = @transform_1, window_bounds = array<i64: 128, 128>}, {pipeline_mode = #tpu.pipeline_mode<synchronous>, transform_indices = @transform_2, window_bounds = array<i64: 128, 128>}, {pipeline_mode = #tpu.pipeline_mode<synchronous>, transform_indices = @transform_3, window_bounds = array<i64: 1, 128>}, {pipeline_mode = #tpu.pipeline_mode<synchronous>, transform_indices = @transform_4, window_bounds = array<i64: 128, 32>}, {pipeline_mode = #tpu.pipeline_mode<synchronous>, transform_indices = @transform_5, window_bounds = array<i64: 1, 32>}, {transform_indices = @transform_6, window_bounds = array<i64: 1, 32>}]} {
    %c0 = arith.constant 0 : index
    %c0_0 = arith.constant 0 : index
    %0 = vector.load %arg1[%c0, %c0_0] : memref<1x128xf32, #tpu.memory_space<vmem>>, vector<1x128xf32>
    %c0_1 = arith.constant 0 : index
    %c0_2 = arith.constant 0 : index
    %1 = vector.load %arg2[%c0_1, %c0_2] : memref<128x128xf32, #tpu.memory_space<vmem>>, vector<128x128xf32>
    %cst = arith.constant dense<0.000000e+00> : vector<1x128xf32>
    %2 = tpu.matmul %0, %1, %cst {dimension_numbers = #tpu.dot_dimension_numbers<[1], [0], [0], [1], [0, 0, 1, 1], [], []>} : vector<1x128xf32>, vector<128x128xf32>, vector<1x128xf32> -> vector<1x128xf32>
    %cst_3 = arith.constant 0.000000e+00 : f32
    %3 = vector.broadcast %cst_3 : f32 to vector<1x128xf32>
    %4 = arith.maximumf %2, %3 : vector<1x128xf32>
    %c0_4 = arith.constant 0 : index
    %c0_5 = arith.constant 0 : index
    %5 = vector.load %arg3[%c0_4, %c0_5] : memref<128x128xf32, #tpu.memory_space<vmem>>, vector<128x128xf32>
    %cst_6 = arith.constant dense<0.000000e+00> : vector<1x128xf32>
    %6 = tpu.matmul %4, %5, %cst_6 {dimension_numbers = #tpu.dot_dimension_numbers<[1], [0], [0], [1], [0, 0, 1, 1], [], []>} : vector<1x128xf32>, vector<128x128xf32>, vector<1x128xf32> -> vector<1x128xf32>
    %c0_7 = arith.constant 0 : index
    %c0_8 = arith.constant 0 : index
    %7 = vector.load %arg4[%c0_7, %c0_8] : memref<1x128xf32, #tpu.memory_space<vmem>>, vector<1x128xf32>
    %8 = arith.addf %6, %7 : vector<1x128xf32>
    %cst_9 = arith.constant 0.000000e+00 : f32
    %9 = vector.broadcast %cst_9 : f32 to vector<1x128xf32>
    %10 = arith.maximumf %8, %9 : vector<1x128xf32>
    %c0_10 = arith.constant 0 : index
    %c0_11 = arith.constant 0 : index
    %11 = vector.load %arg5[%c0_10, %c0_11] : memref<128x32xf32, #tpu.memory_space<vmem>>, vector<128x32xf32>
    %cst_12 = arith.constant dense<0.000000e+00> : vector<1x32xf32>
    %12 = tpu.matmul %10, %11, %cst_12 {dimension_numbers = #tpu.dot_dimension_numbers<[1], [0], [0], [1], [0, 0, 1, 1], [], []>} : vector<1x128xf32>, vector<128x32xf32>, vector<1x32xf32> -> vector<1x32xf32>
    %c0_13 = arith.constant 0 : index
    %c0_14 = arith.constant 0 : index
    %13 = vector.load %arg6[%c0_13, %c0_14] : memref<1x32xf32, #tpu.memory_space<vmem>>, vector<1x32xf32>
    %14 = arith.addf %12, %13 : vector<1x32xf32>
    %c0_15 = arith.constant 0 : index
    %c0_16 = arith.constant 0 : index
    %15 = vector.load %arg7[%c0_15, %c0_16] : memref<1x32xf32, #tpu.memory_space<vmem>>, vector<1x32xf32>
    tpu.vector_store %arg7[%c0_15, %c0_16], %14 {strides = array<i32>} : memref<1x32xf32, #tpu.memory_space<vmem>>, vector<1x32xf32>,
    return
  }
  func.func @transform_0(%arg0: i32) -> (i32, i32) {
    %c0_i32 = arith.constant 0 : i32
    %c0_i32_0 = arith.constant 0 : i32
    return %arg0, %c0_i32 : i32, i32
  }
  func.func @transform_1(%arg0: i32) -> (i32, i32) {
    %c0_i32 = arith.constant 0 : i32
    %c0_i32_0 = arith.constant 0 : i32
    %c0_i32_1 = arith.constant 0 : i32
    return %c0_i32, %c0_i32_0 : i32, i32
  }
  func.func @transform_2(%arg0: i32) -> (i32, i32) {
    %c0_i32 = arith.constant 0 : i32
    %c0_i32_0 = arith.constant 0 : i32
    %c0_i32_1 = arith.constant 0 : i32
    return %c0_i32, %c0_i32_0 : i32, i32
  }
  func.func @transform_3(%arg0: i32) -> (i32, i32) {
    %c0_i32 = arith.constant 0 : i32
    %c0_i32_0 = arith.constant 0 : i32
    %c0_i32_1 = arith.constant 0 : i32
    return %c0_i32, %c0_i32_0 : i32, i32
  }
  func.func @transform_4(%arg0: i32) -> (i32, i32) {
    %c0_i32 = arith.constant 0 : i32
    %c0_i32_0 = arith.constant 0 : i32
    %c0_i32_1 = arith.constant 0 : i32
    return %c0_i32, %c0_i32_0 : i32, i32
  }
  func.func @transform_5(%arg0: i32) -> (i32, i32) {
    %c0_i32 = arith.constant 0 : i32
    %c0_i32_0 = arith.constant 0 : i32
    %c0_i32_1 = arith.constant 0 : i32
    return %c0_i32, %c0_i32_0 : i32, i32
  }
  func.func @transform_6(%arg0: i32) -> (i32, i32) {
    %c0_i32 = arith.constant 0 : i32
    %c0_i32_0 = arith.constant 0 : i32
    return %arg0, %c0_i32 : i32, i32
  }
}

</mosaic_0001>

<llo_original>
// kernel: tpu_custom_call.1
$region0: #{tpu_custom_call.1}
  #allocation0 [shape = 'u32[]', space=smem, size = 0x4, offset = 0x4, fixed_abs, tag = 'smem constant byte address 0x4 - core index']
  #allocation1 [shape = 'u32[144,128]{1,0:T(1,128)}', space=vmem, size = 0x12000, scoped, tag = 'internal scratch']
  %s0 = inlined_call_operand.vmem [shape: f32[1,128], index: 0, kind: input, shape index: {}]
  %s1 = inlined_call_operand.vmem [shape: f32[128,128], index: 1, kind: input, shape index: {}]
  %s2 = inlined_call_operand.hbm [shape: f32[128,128], index: 2, kind: input, shape index: {}]
  %s3 = inlined_call_operand.vmem [shape: f32[1,128], index: 3, kind: input, shape index: {}]
  %s4 = inlined_call_operand.vmem [shape: f32[128,32], index: 4, kind: input, shape index: {}]
  %s5 = inlined_call_operand.vmem [shape: f32[1,32], index: 5, kind: input, shape index: {}]
  %s6 = inlined_call_operand.hbm [shape: f32[1,32], index: 6, kind: output, shape index: {}]
  %s7 = sld [smem:[#allocation0]]
  $region38: #{tpu_custom_call.1} parent=0
    _
  %s9 = ssub.s32 1, %s7
  %s10 = scalar_select 0, %s9, %s7
  $region1: #{tpu_custom_call.1} parent=0
    #allocation2 [shape = 'u8[65536]{0}', space=vmem, size = 0x10000, scoped, tag = 'input window, operand 2, single buffered']
    #allocation3 [shape = 's32[1]{0}', space=sflag, size = 0x4, scoped, tag = 'scoped memory for tpu_custom_call.1']
    #allocation4 [shape = 's32[1]{0}', space=sflag, size = 0x4, scoped, tag = 'scoped memory for tpu_custom_call.1']
    #allocation5 [shape = 'u8[512]{0}', space=vmem, size = 0x400, scoped, tag = 'output window, operand 0, single buffered']
    %11 = vsyncpa [#allocation3], 0
    %12 = vsyncpa [#allocation4], 0
    // Predicated region
    $region2: #{tpu_custom_call.1} parent=1 // pred_check
      _
    $region3: #{tpu_custom_call.1} parent=1 // pred_check_branch
      %14 = sbr.rel (0) target = $region5
    $region4: #{tpu_custom_call.1} parent=1 // pred_region
      _
    $region5: #{tpu_custom_call.1} parent=1 // pred_fallthru
      _
    // Predicated region
    $region6: #{tpu_custom_call.1} parent=1 // pred_check
      _
    $region7: #{tpu_custom_call.1} parent=1 // pred_check_branch
      %16 = sbr.rel (0) target = $region9
    $region8: #{tpu_custom_call.1} parent=1 // pred_region
      _
    $region9: #{tpu_custom_call.1} parent=1 // pred_fallthru
      _
    // Predicated region
    $region10: #{tpu_custom_call.1} parent=1 // pred_check
      _
    $region11: #{tpu_custom_call.1} parent=1 // pred_check_branch
      %18 = sbr.rel (0) target = $region13
    $region12: #{tpu_custom_call.1} parent=1 // pred_region
      %s20 = ssub.s32 2048, 2048
      %21 = vsyncadd [#allocation3], %s20
      %s22 = sshll.u32 [#allocation2], 4
      %s23 = int_to_ptr.vmem [resolvable:$true] %s22
      %28 = dma.hbm_to_vmem [thread:$0]  %s2, 2048, %s23, [#allocation3], 128, 128, 8
    $region13: #{tpu_custom_call.1} parent=1 // pred_fallthru
      _
    // Predicated region
    $region14: #{tpu_custom_call.1} parent=1 // pred_check
      _
    $region15: #{tpu_custom_call.1} parent=1 // pred_check_branch
      %30 = sbr.rel (0) target = $region17
    $region16: #{tpu_custom_call.1} parent=1 // pred_region
      _
    $region17: #{tpu_custom_call.1} parent=1 // pred_fallthru
      _
    // Predicated region
    $region18: #{tpu_custom_call.1} parent=1 // pred_check
      _
    $region19: #{tpu_custom_call.1} parent=1 // pred_check_branch
      %32 = sbr.rel (0) target = $region21
    $region20: #{tpu_custom_call.1} parent=1 // pred_region
      _
    $region21: #{tpu_custom_call.1} parent=1 // pred_fallthru
      _
    // Predicated region
    $region22: #{tpu_custom_call.1} parent=1 // pred_check
      _
    $region23: #{tpu_custom_call.1} parent=1 // pred_check_branch
      %34 = sbr.rel (0) target = $region25
    $region24: #{tpu_custom_call.1} parent=1 // pred_region
      _
    $region25: #{tpu_custom_call.1} parent=1 // pred_fallthru
      _
    // Predicated region
    $region26: #{tpu_custom_call.1} parent=1 // pred_check
      _
    $region27: #{tpu_custom_call.1} parent=1 // pred_check_branch
      %36 = sbr.rel (0) target = $region29
    $region28: #{tpu_custom_call.1} parent=1 // pred_region
      %37 = dma.done [#allocation3], 2048
    $region29: #{tpu_custom_call.1} parent=1 // pred_fallthru
      _
    %v38 = vld [vmem:[%s0] sm:$0x1]
    %v39 = vld [vmem:[%s1] sm:$0xff]
    %v40 = vld [vmem:[%s1 + $0x8] sm:$0xff]
    %v41 = vld [vmem:[%s1 + $0x10] sm:$0xff]
    %v42 = vld [vmem:[%s1 + $0x18] sm:$0xff]
    %v43 = vld [vmem:[%s1 + $0x20] sm:$0xff]
    %v44 = vld [vmem:[%s1 + $0x28] sm:$0xff]
    %v45 = vld [vmem:[%s1 + $0x30] sm:$0xff]
    %v46 = vld [vmem:[%s1 + $0x38] sm:$0xff]
    %v47 = vld [vmem:[%s1 + $0x40] sm:$0xff]
    %v48 = vld [vmem:[%s1 + $0x48] sm:$0xff]
    %v49 = vld [vmem:[%s1 + $0x50] sm:$0xff]
    %v50 = vld [vmem:[%s1 + $0x58] sm:$0xff]
    %v51 = vld [vmem:[%s1 + $0x60] sm:$0xff]
    %v52 = vld [vmem:[%s1 + $0x68] sm:$0xff]
    %v53 = vld [vmem:[%s1 + $0x70] sm:$0xff]
    %v54 = vld [vmem:[%s1 + $0x78] sm:$0xff]
    %55 = vmatprep.subr.mxu0 0.0
    %56 = vmatpush1.msra.mxu0 %v39
    %57 = vmatprep.subr.mxu0 0.0
    %58 = vmatpush1.msra.mxu0 %v40
    %59 = vmatprep.subr.mxu0 0.0
    %60 = vmatpush1.msra.mxu0 %v41
    %61 = vmatprep.subr.mxu0 0.0
    %62 = vmatpush1.msra.mxu0 %v42
    %63 = vmatprep.subr.mxu0 0.0
    %64 = vmatpush1.msra.mxu0 %v43
    %65 = vmatprep.subr.mxu0 0.0
    %66 = vmatpush1.msra.mxu0 %v44
    %67 = vmatprep.subr.mxu0 0.0
    %68 = vmatpush1.msra.mxu0 %v45
    %69 = vmatprep.subr.mxu0 0.0
    %70 = vmatpush1.msra.mxu0 %v46
    %71 = vmatprep.subr.mxu0 0.0
    %72 = vmatpush1.msra.mxu0 %v47
    %73 = vmatprep.subr.mxu0 0.0
    %74 = vmatpush1.msra.mxu0 %v48
    %75 = vmatprep.subr.mxu0 0.0
    %76 = vmatpush1.msra.mxu0 %v49
    %77 = vmatprep.subr.mxu0 0.0
    %78 = vmatpush1.msra.mxu0 %v50
    %79 = vmatprep.subr.mxu0 0.0
    %80 = vmatpush1.msra.mxu0 %v51
    %81 = vmatprep.subr.mxu0 0.0
    %82 = vmatpush1.msra.mxu0 %v52
    %83 = vmatprep.subr.mxu0 0.0
    %84 = vmatpush1.msra.mxu0 %v53
    %85 = vmatprep.subr.mxu0 0.0
    %86 = vmatpush1.msra.mxu0 %v54
    %87 = vmatprep.subr.mxu0 0.0
    %88 = vmatpush1.msra.mxu0 0.0
    %89 = vmatprep.subr.mxu0 0.0
    %90 = vmatpush1.msra.mxu0 0.0
    %91 = vmatprep.subr.mxu0 0.0
    %92 = vmatpush1.msra.mxu0 0.0
    %93 = vmatprep.subr.mxu0 0.0
    %94 = vmatpush1.msra.mxu0 0.0
    %95 = vmatprep.subr.mxu0 0.0
    %96 = vmatpush1.msra.mxu0 0.0
    %97 = vmatprep.subr.mxu0 0.0
    %98 = vmatpush1.msra.mxu0 0.0
    %99 = vmatprep.subr.mxu0 0.0
    %100 = vmatpush1.msra.mxu0 0.0
    %101 = vmatprep.subr.mxu0 0.0
    %102 = vmatpush1.msra.mxu0 0.0
    %103 = vmatprep.subr.mxu0 0.0
    %104 = vmatpush1.msra.mxu0 0.0
    %105 = vmatprep.subr.mxu0 0.0
    %106 = vmatpush1.msra.mxu0 0.0
    %107 = vmatprep.subr.mxu0 0.0
    %108 = vmatpush1.msra.mxu0 0.0
    %109 = vmatprep.subr.mxu0 0.0
    %110 = vmatpush1.msra.mxu0 0.0
    %111 = vmatprep.subr.mxu0 0.0
    %112 = vmatpush1.msra.mxu0 0.0
    %113 = vmatprep.subr.mxu0 0.0
    %114 = vmatpush1.msra.mxu0 0.0
    %115 = vmatprep.subr.mxu0 0.0
    %116 = vmatpush1.msra.mxu0 0.0
    %117 = vmatprep.subr.mxu0 0.0
    %118 = vmatpush1.msra.mxu0 0.0
    %119 = vmatprep.mubr.f32.mxu0 0.0
    %120 = vmatmul.mubr.f32.gmra.mrb[0].mxu0 %v38
    %v121 = vpop.f32.mrb[0].mxu0
    %v122 = vadd.f32 0.0, %v121
    %v123 = vpop.f32.mrb[0].mxu0
    %124 = vdwg.mxu0
    %v125 = vmax.f32 %v122, 0.0
    %v126 = vld [vmem:[#allocation2] sm:$0xff]
    %v127 = vld [vmem:[#allocation2 + $0x8] sm:$0xff]
    %v128 = vld [vmem:[#allocation2 + $0x10] sm:$0xff]
    %v129 = vld [vmem:[#allocation2 + $0x18] sm:$0xff]
    %v130 = vld [vmem:[#allocation2 + $0x20] sm:$0xff]
    %v131 = vld [vmem:[#allocation2 + $0x28] sm:$0xff]
    %v132 = vld [vmem:[#allocation2 + $0x30] sm:$0xff]
    %v133 = vld [vmem:[#allocation2 + $0x38] sm:$0xff]
    %v134 = vld [vmem:[#allocation2 + $0x40] sm:$0xff]
    %v135 = vld [vmem:[#allocation2 + $0x48] sm:$0xff]
    %v136 = vld [vmem:[#allocation2 + $0x50] sm:$0xff]
    %v137 = vld [vmem:[#allocation2 + $0x58] sm:$0xff]
    %v138 = vld [vmem:[#allocation2 + $0x60] sm:$0xff]
    %v139 = vld [vmem:[#allocation2 + $0x68] sm:$0xff]
    %v140 = vld [vmem:[#allocation2 + $0x70] sm:$0xff]
    %v141 = vld [vmem:[#allocation2 + $0x78] sm:$0xff]
    %v142 = vld [vmem:[%s3] sm:$0x1]
    %143 = vmatprep.subr.mxu0 0.0
    %144 = vmatpush1.msra.mxu0 %v126
    %145 = vmatprep.subr.mxu0 0.0
    %146 = vmatpush1.msra.mxu0 %v127
    %147 = vmatprep.subr.mxu0 0.0
    %148 = vmatpush1.msra.mxu0 %v128
    %149 = vmatprep.subr.mxu0 0.0
    %150 = vmatpush1.msra.mxu0 %v129
    %151 = vmatprep.subr.mxu0 0.0
    %152 = vmatpush1.msra.mxu0 %v130
    %153 = vmatprep.subr.mxu0 0.0
    %154 = vmatpush1.msra.mxu0 %v131
    %155 = vmatprep.subr.mxu0 0.0
    %156 = vmatpush1.msra.mxu0 %v132
    %157 = vmatprep.subr.mxu0 0.0
    %158 = vmatpush1.msra.mxu0 %v133
    %159 = vmatprep.subr.mxu0 0.0
    %160 = vmatpush1.msra.mxu0 %v134
    %161 = vmatprep.subr.mxu0 0.0
    %162 = vmatpush1.msra.mxu0 %v135
    %163 = vmatprep.subr.mxu0 0.0
    %164 = vmatpush1.msra.mxu0 %v136
    %165 = vmatprep.subr.mxu0 0.0
    %166 = vmatpush1.msra.mxu0 %v137
    %167 = vmatprep.subr.mxu0 0.0
    %168 = vmatpush1.msra.mxu0 %v138
    %169 = vmatprep.subr.mxu0 0.0
    %170 = vmatpush1.msra.mxu0 %v139
    %171 = vmatprep.subr.mxu0 0.0
    %172 = vmatpush1.msra.mxu0 %v140
    %173 = vmatprep.subr.mxu0 0.0
    %174 = vmatpush1.msra.mxu0 %v141
    %175 = vmatprep.subr.mxu0 0.0
    %176 = vmatpush1.msra.mxu0 0.0
    %177 = vmatprep.subr.mxu0 0.0
    %178 = vmatpush1.msra.mxu0 0.0
    %179 = vmatprep.subr.mxu0 0.0
    %180 = vmatpush1.msra.mxu0 0.0
    %181 = vmatprep.subr.mxu0 0.0
    %182 = vmatpush1.msra.mxu0 0.0
    %183 = vmatprep.subr.mxu0 0.0
    %184 = vmatpush1.msra.mxu0 0.0
    %185 = vmatprep.subr.mxu0 0.0
    %186 = vmatpush1.msra.mxu0 0.0
    %187 = vmatprep.subr.mxu0 0.0
    %188 = vmatpush1.msra.mxu0 0.0
    %189 = vmatprep.subr.mxu0 0.0
    %190 = vmatpush1.msra.mxu0 0.0
    %191 = vmatprep.subr.mxu0 0.0
    %192 = vmatpush1.msra.mxu0 0.0
    %193 = vmatprep.subr.mxu0 0.0
    %194 = vmatpush1.msra.mxu0 0.0
    %195 = vmatprep.subr.mxu0 0.0
    %196 = vmatpush1.msra.mxu0 0.0
    %197 = vmatprep.subr.mxu0 0.0
    %198 = vmatpush1.msra.mxu0 0.0
    %199 = vmatprep.subr.mxu0 0.0
    %200 = vmatpush1.msra.mxu0 0.0
    %201 = vmatprep.subr.mxu0 0.0
    %202 = vmatpush1.msra.mxu0 0.0
    %203 = vmatprep.subr.mxu0 0.0
    %204 = vmatpush1.msra.mxu0 0.0
    %205 = vmatprep.subr.mxu0 0.0
    %206 = vmatpush1.msra.mxu0 0.0
    %207 = vmatprep.mubr.f32.mxu0 0.0
    %208 = vmatmul.mubr.f32.gmra.mrb[0].mxu0 %v125
    %v209 = vpop.f32.mrb[0].mxu0
    %v210 = vadd.f32 %v142, %v209
    %v211 = vpop.f32.mrb[0].mxu0
    %212 = vdwg.mxu0
    %v213 = vmax.f32 %v210, 0.0
    %v214 = vld [vmem:[%s4] sm:$0xff]
    %v215 = vld [vmem:[%s4 + $0x8] sm:$0xff]
    %v216 = vld [vmem:[%s4 + $0x10] sm:$0xff]
    %v217 = vld [vmem:[%s4 + $0x18] sm:$0xff]
    %v218 = vld [vmem:[%s4 + $0x20] sm:$0xff]
    %v219 = vld [vmem:[%s4 + $0x28] sm:$0xff]
    %v220 = vld [vmem:[%s4 + $0x30] sm:$0xff]
    %v221 = vld [vmem:[%s4 + $0x38] sm:$0xff]
    %v222 = vld [vmem:[%s4 + $0x40] sm:$0xff]
    %v223 = vld [vmem:[%s4 + $0x48] sm:$0xff]
    %v224 = vld [vmem:[%s4 + $0x50] sm:$0xff]
    %v225 = vld [vmem:[%s4 + $0x58] sm:$0xff]
    %v226 = vld [vmem:[%s4 + $0x60] sm:$0xff]
    %v227 = vld [vmem:[%s4 + $0x68] sm:$0xff]
    %v228 = vld [vmem:[%s4 + $0x70] sm:$0xff]
    %v229 = vld [vmem:[%s4 + $0x78] sm:$0xff]
    %v230 = vld [vmem:[%s5] sm:$0x1]
    %231 = vmatprep.subr.mxu0 0.0
    %232 = vmatpush1.msra.mxu0 %v214
    %233 = vmatprep.subr.mxu0 0.0
    %234 = vmatpush1.msra.mxu0 %v215
    %235 = vmatprep.subr.mxu0 0.0
    %236 = vmatpush1.msra.mxu0 %v216
    %237 = vmatprep.subr.mxu0 0.0
    %238 = vmatpush1.msra.mxu0 %v217
    %239 = vmatprep.subr.mxu0 0.0
    %240 = vmatpush1.msra.mxu0 %v218
    %241 = vmatprep.subr.mxu0 0.0
    %242 = vmatpush1.msra.mxu0 %v219
    %243 = vmatprep.subr.mxu0 0.0
    %244 = vmatpush1.msra.mxu0 %v220
    %245 = vmatprep.subr.mxu0 0.0
    %246 = vmatpush1.msra.mxu0 %v221
    %247 = vmatprep.subr.mxu0 0.0
    %248 = vmatpush1.msra.mxu0 %v222
    %249 = vmatprep.subr.mxu0 0.0
    %250 = vmatpush1.msra.mxu0 %v223
    %251 = vmatprep.subr.mxu0 0.0
    %252 = vmatpush1.msra.mxu0 %v224
    %253 = vmatprep.subr.mxu0 0.0
    %254 = vmatpush1.msra.mxu0 %v225
    %255 = vmatprep.subr.mxu0 0.0
    %256 = vmatpush1.msra.mxu0 %v226
    %257 = vmatprep.subr.mxu0 0.0
    %258 = vmatpush1.msra.mxu0 %v227
    %259 = vmatprep.subr.mxu0 0.0
    %260 = vmatpush1.msra.mxu0 %v228
    %261 = vmatprep.subr.mxu0 0.0
    %262 = vmatpush1.msra.mxu0 %v229
    %263 = vmatprep.subr.mxu0 0.0
    %264 = vmatpush1.msra.mxu0 0.0
    %265 = vmatprep.subr.mxu0 0.0
    %266 = vmatpush1.msra.mxu0 0.0
    %267 = vmatprep.subr.mxu0 0.0
    %268 = vmatpush1.msra.mxu0 0.0
    %269 = vmatprep.subr.mxu0 0.0
    %270 = vmatpush1.msra.mxu0 0.0
    %271 = vmatprep.subr.mxu0 0.0
    %272 = vmatpush1.msra.mxu0 0.0
    %273 = vmatprep.subr.mxu0 0.0
    %274 = vmatpush1.msra.mxu0 0.0
    %275 = vmatprep.subr.mxu0 0.0
    %276 = vmatpush1.msra.mxu0 0.0
    %277 = vmatprep.subr.mxu0 0.0
    %278 = vmatpush1.msra.mxu0 0.0
    %279 = vmatprep.subr.mxu0 0.0
    %280 = vmatpush1.msra.mxu0 0.0
    %281 = vmatprep.subr.mxu0 0.0
    %282 = vmatpush1.msra.mxu0 0.0
    %283 = vmatprep.subr.mxu0 0.0
    %284 = vmatpush1.msra.mxu0 0.0
    %285 = vmatprep.subr.mxu0 0.0
    %286 = vmatpush1.msra.mxu0 0.0
    %287 = vmatprep.subr.mxu0 0.0
    %288 = vmatpush1.msra.mxu0 0.0
    %289 = vmatprep.subr.mxu0 0.0
    %290 = vmatpush1.msra.mxu0 0.0
    %291 = vmatprep.subr.mxu0 0.0
    %292 = vmatpush1.msra.mxu0 0.0
    %293 = vmatprep.subr.mxu0 0.0
    %294 = vmatpush1.msra.mxu0 0.0
    %295 = vmatprep.mubr.f32.mxu0 0.0
    %296 = vmatmul.mubr.f32.gmra.mrb[0].mxu0 %v213
    %v297 = vpop.f32.mrb[0].mxu0
    %v298 = vadd.f32 %v230, %v297
    %v299 = vpop.f32.mrb[0].mxu0
    %300 = vdwg.mxu0
    %vm301 = vcmask 253952
    %302 = vst.msk [vmem:[#allocation5] sm:$0x1] %vm301, %v298
    // Predicated region
    $region30: #{tpu_custom_call.1} parent=1 // pred_check
      _
    $region31: #{tpu_custom_call.1} parent=1 // pred_check_branch
      %304 = sbr.rel (0) target = $region33
    $region32: #{tpu_custom_call.1} parent=1 // pred_region
      %s306 = ssub.s32 16, 16
      %307 = vsyncadd [#allocation4], %s306
      %s309 = sshll.u32 [#allocation5], 4
      %s310 = int_to_ptr.vmem [resolvable:$true] %s309
      %312 = dma.vmem_to_hbm [thread:$0]  %s310, 16, %s6, [#allocation4]
    $region33: #{tpu_custom_call.1} parent=1 // pred_fallthru
      _
    // Predicated region
    $region34: #{tpu_custom_call.1} parent=1 // pred_check
      _
    $region35: #{tpu_custom_call.1} parent=1 // pred_check_branch
      %314 = sbr.rel (0) target = $region37
    $region36: #{tpu_custom_call.1} parent=1 // pred_region
      %315 = dma.done [#allocation4], 16
    $region37: #{tpu_custom_call.1} parent=1 // pred_fallthru
      _
    %316 = vsyncpa [#allocation3], 1
    %317 = vsyncpa [#allocation4], 1

</llo_original>
